<compile_context>
chip_gen: v7x
topology: tpu7x:2x2x1
jax: 0.10.0
libtpu: 0.0.40
codegen_flags: <defaults>
</compile_context>

<pallas_src>
import jax
import jax.numpy as jnp
from jax.experimental import pallas as pl
from jax.experimental.pallas import tpu as pltpu

LANE = 128
SUBLANE = 8


def _round_up(n, m):
    return ((n + m - 1) // m) * m


def mlp_kernel(x_ref, w1_ref, b1_ref, w2_ref, b2_ref, out_ref):
    # x_ref:  [TM, D_in]    f32  (cast to bf16 in-kernel, right before the MXU)
    # w1_ref: [D_in, H_pad] bf16     b1_ref: [1, H_pad] f32
    # w2_ref: [H_pad, N_pad] bf16    b2_ref: [1, N_pad] f32 (-inf on padded logit columns)
    # out_ref:[TM, N_pad]   f32
    x = x_ref[...].astype(w1_ref.dtype)

    # layer_input: x @ W1 + b1 (bf16 operands, f32 accumulation on the MXU)
    h = jnp.dot(x, w1_ref[...], preferred_element_type=jnp.float32) + b1_ref[...]

    # dropout: nn.Dropout() is identity in eval/inference mode
    # TODO(synk): training-mode dropout (p=0.5) would need pltpu.prng_seed/prng_random_bits masking.

    # ReLU in f32 (v5e has no bf16 VPU path)
    h = jnp.maximum(h, 0.0)

    # layer_hidden: h @ W2 + b2
    logits = (
        jnp.dot(h.astype(w2_ref.dtype), w2_ref[...], preferred_element_type=jnp.float32)
        + b2_ref[...]
    )

    # softmax over dim=1. Padded columns carry a -inf bias -> exp() == 0 exactly, so they
    # contribute nothing to the row sum.  Exact divide keeps row sums at 1 to f32 precision
    # (this op is HBM-bound, so the divide is free).
    m = jnp.max(logits, axis=1, keepdims=True)
    e = jnp.exp(logits - m)
    denom = jnp.sum(e, axis=1, keepdims=True)
    out_ref[...] = (e / denom).astype(out_ref.dtype)


def mlp_forward(x_nchw, w1, b1, w2, b2, *, tm=1024):
    """x_nchw: [B, C, H, W] float32. w1: [D_in, H], b1: [H], w2: [H, D_out], b2: [D_out].
    Returns softmax probabilities [B, D_out] (float32)."""
    B = x_nchw.shape[0]
    d_in = x_nchw.shape[1] * x_nchw.shape[2] * x_nchw.shape[3]
    x_flat = x_nchw.reshape(B, d_in)  # matches torch x.view(-1, C*H*W); stays f32 in HBM

    d_hidden = w1.shape[1]
    d_out = w2.shape[1]

    # --- lane padding (zero-pad hidden, -inf-bias-pad output columns); weights are tiny ---
    h_pad = max(_round_up(d_hidden, LANE), LANE)
    n_pad = max(_round_up(d_out, LANE), LANE)

    w1_p = jnp.zeros((d_in, h_pad), jnp.float32).at[:, :d_hidden].set(w1).astype(jnp.bfloat16)
    b1_p = jnp.zeros((1, h_pad), jnp.float32).at[0, :d_hidden].set(b1)
    w2_p = jnp.zeros((h_pad, n_pad), jnp.float32).at[:d_hidden, :d_out].set(w2).astype(jnp.bfloat16)
    b2_p = jnp.full((1, n_pad), -jnp.inf, jnp.float32).at[0, :d_out].set(b2)

    # --- batch tiling: no padding pass over x ---
    # Cap tm so there are >= 2 grid steps whenever B allows (v7x: both TCs get work).
    tm_cap = _round_up(pl.cdiv(B, 2), SUBLANE)
    tm = min(max(_round_up(tm, SUBLANE), SUBLANE), tm_cap)
    if B <= tm:
        tm = B  # single full-extent block: always layout-legal, no ragged edge
    grid = (pl.cdiv(B, tm),)

    # VMEM budget from actual block sizes (double-buffered x/out tiles, resident weights,
    # in-kernel intermediates), with headroom; capped at 48 MiB for v7x's 64 MiB/TC VMEM.
    vmem_est = (
        2 * tm * d_in * 4                            # x tiles (f32, double-buffered)
        + 2 * tm * n_pad * 4                         # out tiles (f32, double-buffered)
        + 2 * (d_in * h_pad + h_pad * n_pad) * 2     # bf16 weights
        + 2 * (h_pad + n_pad) * 4                    # biases
        + tm * (h_pad + n_pad) * 4                   # h / logits intermediates
    )
    vmem_limit = int(min(max(2 * vmem_est, 16 * 1024 * 1024), 48 * 1024 * 1024))

    cost = pl.CostEstimate(
        flops=2 * B * (d_in * h_pad + h_pad * n_pad),
        transcendentals=B * n_pad,
        bytes_accessed=(
            x_flat.size * 4
            + w1_p.size * 2
            + w2_p.size * 2
            + (b1_p.size + b2_p.size) * 4
            + B * n_pad * 4
        ),
    )

    out_padded = pl.pallas_call(
        mlp_kernel,
        out_shape=jax.ShapeDtypeStruct((B, n_pad), jnp.float32),
        grid=grid,
        in_specs=[
            pl.BlockSpec((tm, d_in), lambda i: (i, 0)),      # x: tiled over batch, f32
            pl.BlockSpec((d_in, h_pad), lambda i: (0, 0)),   # W1: VMEM-resident (bf16)
            pl.BlockSpec((1, h_pad), lambda i: (0, 0)),      # b1
            pl.BlockSpec((h_pad, n_pad), lambda i: (0, 0)),  # W2 (bf16)
            pl.BlockSpec((1, n_pad), lambda i: (0, 0)),      # b2 (-inf on pad cols)
        ],
        out_specs=pl.BlockSpec((tm, n_pad), lambda i: (i, 0)),
        compiler_params=pltpu.CompilerParams(
            dimension_semantics=("parallel",),
            vmem_limit_bytes=vmem_limit,
        ),
        cost_estimate=cost,
    )(x_flat, w1_p, b1_p, w2_p, b2_p)

    # Slice back to the true class count (rows already exact; only columns are padded).
    return out_padded[:, :d_out]


if __name__ == "__main__":
    # Small shapes consistent with the module: B=2, C=4, H=W=16 -> dim_in=1024, dim_out=10
    B, C, H, W = 2, 4, 16, 16
    dim_in = C * H * W
    dim_hidden = 32
    dim_out = 10

    key = jax.random.PRNGKey(0)
    kx, k1, kb1, k2, kb2 = jax.random.split(key, 5)

    x = jax.random.normal(kx, (B, C, H, W), dtype=jnp.float32)

    # Deterministic parameter init (uniform, like nn.Linear's default bound 1/sqrt(fan_in)).
    bound1 = 1.0 / (dim_in ** 0.5)
    w1 = jax.random.uniform(k1, (dim_in, dim_hidden), jnp.float32, -bound1, bound1)
    b1 = jax.random.uniform(kb1, (dim_hidden,), jnp.float32, -bound1, bound1)

    bound2 = 1.0 / (dim_hidden ** 0.5)
    w2 = jax.random.uniform(k2, (dim_hidden, dim_out), jnp.float32, -bound2, bound2)
    b2 = jax.random.uniform(kb2, (dim_out,), jnp.float32, -bound2, bound2)

    out = mlp_forward(x, w1, b1, w2, b2)
    out = jax.block_until_ready(out)

    # Pure-JAX f32 reference (tolerance covers bf16 weight operands / f32 accumulation).
    x_flat = x.reshape(B, dim_in)
    ref = jax.nn.softmax(jnp.maximum(x_flat @ w1 + b1, 0.0) @ w2 + b2, axis=1)

    assert out.shape == (B, dim_out)
    assert jnp.allclose(jnp.sum(out, axis=1), 1.0, atol=1e-4)
    assert jnp.allclose(out, ref, atol=2e-2, rtol=2e-2)

    print("KERNEL_OK")
</pallas_src>

<mosaic_0001>
module attributes {stable_mosaic.version = 11 : i64} {
  func.func @mlp_kernel(%arg0: i32, %arg1: memref<2x1024xf32, #tpu.memory_space<vmem>>, %arg2: memref<1024x128xbf16, #tpu.memory_space<vmem>>, %arg3: memref<1x128xf32, #tpu.memory_space<vmem>>, %arg4: memref<128x128xbf16, #tpu.memory_space<vmem>>, %arg5: memref<1x128xf32, #tpu.memory_space<vmem>>, %arg6: memref<2x128xf32, #tpu.memory_space<vmem>>) attributes {dimension_semantics = [#tpu.dimension_semantics<parallel>], iteration_bounds = array<i64: 1>, scalar_prefetch = 0 : i64, scratch_operands = 0 : i64, tpu.core_type = #tpu.core_type<tc>, window_params = [{transform_indices = @transform_0, window_bounds = array<i64: 2, 1024>}, {pipeline_mode = #tpu.pipeline_mode<synchronous>, transform_indices = @transform_1, window_bounds = array<i64: 1024, 128>}, {pipeline_mode = #tpu.pipeline_mode<synchronous>, transform_indices = @transform_2, window_bounds = array<i64: 1, 128>}, {pipeline_mode = #tpu.pipeline_mode<synchronous>, transform_indices = @transform_3, window_bounds = array<i64: 128, 128>}, {pipeline_mode = #tpu.pipeline_mode<synchronous>, transform_indices = @transform_4, window_bounds = array<i64: 1, 128>}, {transform_indices = @transform_5, window_bounds = array<i64: 2, 128>}]} {
    %c0 = arith.constant 0 : index
    %c0_0 = arith.constant 0 : index
    %0 = vector.load %arg1[%c0, %c0_0] : memref<2x1024xf32, #tpu.memory_space<vmem>>, vector<2x1024xf32>
    %1 = arith.truncf %0 : vector<2x1024xf32> to vector<2x1024xbf16>
    %c0_1 = arith.constant 0 : index
    %c0_2 = arith.constant 0 : index
    %2 = vector.load %arg2[%c0_1, %c0_2] : memref<1024x128xbf16, #tpu.memory_space<vmem>>, vector<1024x128xbf16>
    %cst = arith.constant dense<0.000000e+00> : vector<2x128xf32>
    %3 = tpu.matmul %1, %2, %cst {dimension_numbers = #tpu.dot_dimension_numbers<[1], [0], [0], [1], [0, 0, 1, 1], [], []>} : vector<2x1024xbf16>, vector<1024x128xbf16>, vector<2x128xf32> -> vector<2x128xf32>
    %c0_3 = arith.constant 0 : index
    %c0_4 = arith.constant 0 : index
    %4 = vector.load %arg3[%c0_3, %c0_4] : memref<1x128xf32, #tpu.memory_space<vmem>>, vector<1x128xf32>
    %5 = vector.broadcast %4 : vector<1x128xf32> to vector<2x128xf32>
    %6 = arith.addf %3, %5 : vector<2x128xf32>
    %cst_5 = arith.constant 0.000000e+00 : f32
    %7 = vector.broadcast %cst_5 : f32 to vector<2x128xf32>
    %8 = arith.maximumf %6, %7 : vector<2x128xf32>
    %9 = arith.truncf %8 : vector<2x128xf32> to vector<2x128xbf16>
    %c0_6 = arith.constant 0 : index
    %c0_7 = arith.constant 0 : index
    %10 = vector.load %arg4[%c0_6, %c0_7] : memref<128x128xbf16, #tpu.memory_space<vmem>>, vector<128x128xbf16>
    %cst_8 = arith.constant dense<0.000000e+00> : vector<2x128xf32>
    %11 = tpu.matmul %9, %10, %cst_8 {dimension_numbers = #tpu.dot_dimension_numbers<[1], [0], [0], [1], [0, 0, 1, 1], [], []>} : vector<2x128xbf16>, vector<128x128xbf16>, vector<2x128xf32> -> vector<2x128xf32>
    %c0_9 = arith.constant 0 : index
    %c0_10 = arith.constant 0 : index
    %12 = vector.load %arg5[%c0_9, %c0_10] : memref<1x128xf32, #tpu.memory_space<vmem>>, vector<1x128xf32>
    %13 = vector.broadcast %12 : vector<1x128xf32> to vector<2x128xf32>
    %14 = arith.addf %11, %13 : vector<2x128xf32>
    %cst_11 = arith.constant dense<0xFF800000> : vector<2xf32>
    %15 = vector.multi_reduction <maximumf>, %14, %cst_11 [1] : vector<2x128xf32> to vector<2xf32>
    %16 = vector.shape_cast %15 : vector<2xf32> to vector<2x1xf32>
    %17 = vector.broadcast %16 : vector<2x1xf32> to vector<2x128xf32>
    %18 = arith.subf %14, %17 : vector<2x128xf32>
    %19 = math.exp %18 : vector<2x128xf32>
    %cst_12 = arith.constant dense<0.000000e+00> : vector<2xf32>
    %20 = vector.multi_reduction <add>, %19, %cst_12 [1] : vector<2x128xf32> to vector<2xf32>
    %21 = vector.shape_cast %20 : vector<2xf32> to vector<2x1xf32>
    %22 = vector.broadcast %21 : vector<2x1xf32> to vector<2x128xf32>
    %23 = arith.divf %19, %22 : vector<2x128xf32>
    %c0_13 = arith.constant 0 : index
    %c0_14 = arith.constant 0 : index
    %24 = vector.load %arg6[%c0_13, %c0_14] : memref<2x128xf32, #tpu.memory_space<vmem>>, vector<2x128xf32>
    tpu.vector_store %arg6[%c0_13, %c0_14], %23 {strides = array<i32>} : memref<2x128xf32, #tpu.memory_space<vmem>>, vector<2x128xf32>,
    return
  }
  func.func @transform_0(%arg0: i32) -> (i32, i32) {
    %c0_i32 = arith.constant 0 : i32
    %c0_i32_0 = arith.constant 0 : i32
    return %arg0, %c0_i32 : i32, i32
  }
  func.func @transform_1(%arg0: i32) -> (i32, i32) {
    %c0_i32 = arith.constant 0 : i32
    %c0_i32_0 = arith.constant 0 : i32
    %c0_i32_1 = arith.constant 0 : i32
    return %c0_i32, %c0_i32_0 : i32, i32
  }
  func.func @transform_2(%arg0: i32) -> (i32, i32) {
    %c0_i32 = arith.constant 0 : i32
    %c0_i32_0 = arith.constant 0 : i32
    %c0_i32_1 = arith.constant 0 : i32
    return %c0_i32, %c0_i32_0 : i32, i32
  }
  func.func @transform_3(%arg0: i32) -> (i32, i32) {
    %c0_i32 = arith.constant 0 : i32
    %c0_i32_0 = arith.constant 0 : i32
    %c0_i32_1 = arith.constant 0 : i32
    return %c0_i32, %c0_i32_0 : i32, i32
  }
  func.func @transform_4(%arg0: i32) -> (i32, i32) {
    %c0_i32 = arith.constant 0 : i32
    %c0_i32_0 = arith.constant 0 : i32
    %c0_i32_1 = arith.constant 0 : i32
    return %c0_i32, %c0_i32_0 : i32, i32
  }
  func.func @transform_5(%arg0: i32) -> (i32, i32) {
    %c0_i32 = arith.constant 0 : i32
    %c0_i32_0 = arith.constant 0 : i32
    return %arg0, %c0_i32 : i32, i32
  }
}

</mosaic_0001>

<llo_original>
// kernel: tpu_custom_call.1
$region0: #{tpu_custom_call.1}
  #allocation0 [shape = 'u32[]', space=smem, size = 0x4, offset = 0x4, fixed_abs, tag = 'smem constant byte address 0x4 - core index']
  #allocation1 [shape = 'u32[144,128]{1,0:T(1,128)}', space=vmem, size = 0x12000, scoped, tag = 'internal scratch']
  %s0 = inlined_call_operand.hbm [shape: f32[2,1024], index: 0, kind: input, shape index: {}]
  %s1 = inlined_call_operand.hbm [shape: bf16[1024,128], index: 1, kind: input, shape index: {}]
  %s2 = inlined_call_operand.vmem [shape: f32[1,128], index: 2, kind: input, shape index: {}]
  %s3 = inlined_call_operand.hbm [shape: bf16[128,128], index: 3, kind: input, shape index: {}]
  %s4 = inlined_call_operand.vmem [shape: f32[1,128], index: 4, kind: input, shape index: {}]
  %s5 = inlined_call_operand.hbm [shape: f32[2,128], index: 5, kind: output, shape index: {}]
  %s6 = sld [smem:[#allocation0]]
  $region42: #{tpu_custom_call.1} parent=0
    _
  %s8 = ssub.s32 1, %s6
  %s9 = scalar_select 0, %s8, %s6
  $region1: #{tpu_custom_call.1} parent=0
    #allocation2 [shape = 'u8[8192]{0}', space=vmem, size = 0x2000, scoped, tag = 'input window, operand 0, single buffered']
    #allocation3 [shape = 's32[1]{0}', space=sflag, size = 0x4, scoped, tag = 'scoped memory for tpu_custom_call.1']
    #allocation4 [shape = 's32[1]{0}', space=sflag, size = 0x4, scoped, tag = 'scoped memory for tpu_custom_call.1']
    #allocation5 [shape = 'u8[262144]{0}', space=vmem, size = 0x40000, scoped, tag = 'input window, operand 1, single buffered']
    #allocation6 [shape = 's32[1]{0}', space=sflag, size = 0x4, scoped, tag = 'scoped memory for tpu_custom_call.1']
    #allocation7 [shape = 'u8[32768]{0}', space=vmem, size = 0x8000, scoped, tag = 'input window, operand 3, single buffered']
    #allocation8 [shape = 'u8[1024]{0}', space=vmem, size = 0x400, scoped, tag = 'output window, operand 0, single buffered']
    %10 = vsyncpa [#allocation3], 0
    %11 = vsyncpa [#allocation6], 0
    %12 = vsyncpa [#allocation4], 0
    // Predicated region
    $region2: #{tpu_custom_call.1} parent=1 // pred_check
      _
    $region3: #{tpu_custom_call.1} parent=1 // pred_check_branch
      %14 = sbr.rel (0) target = $region5
    $region4: #{tpu_custom_call.1} parent=1 // pred_region
      %s16 = ssub.s32 256, 256
      %17 = vsyncadd [#allocation3], %s16
      %s19 = sshll.u32 [#allocation2], 4
      %s20 = int_to_ptr.vmem [resolvable:$true] %s19
      %22 = dma.hbm_to_vmem [thread:$0]  %s0, 256, %s20, [#allocation3]
    $region5: #{tpu_custom_call.1} parent=1 // pred_fallthru
      _
    // Predicated region
    $region6: #{tpu_custom_call.1} parent=1 // pred_check
      _
    $region7: #{tpu_custom_call.1} parent=1 // pred_check_branch
      %24 = sbr.rel (0) target = $region9
    $region8: #{tpu_custom_call.1} parent=1 // pred_region
      %s26 = ssub.s32 8192, 8192
      %27 = vsyncadd [#allocation6], %s26
      %s28 = sshll.u32 [#allocation5], 4
      %s29 = int_to_ptr.vmem [resolvable:$true] %s28
      %34 = dma.hbm_to_vmem [thread:$0]  %s1, 8192, %s29, [#allocation6], 64, 64, 4
    $region9: #{tpu_custom_call.1} parent=1 // pred_fallthru
      _
    // Predicated region
    $region10: #{tpu_custom_call.1} parent=1 // pred_check
      _
    $region11: #{tpu_custom_call.1} parent=1 // pred_check_branch
      %36 = sbr.rel (0) target = $region13
    $region12: #{tpu_custom_call.1} parent=1 // pred_region
      _
    $region13: #{tpu_custom_call.1} parent=1 // pred_fallthru
      _
    // Predicated region
    $region14: #{tpu_custom_call.1} parent=1 // pred_check
      _
    $region15: #{tpu_custom_call.1} parent=1 // pred_check_branch
      %38 = sbr.rel (0) target = $region17
    $region16: #{tpu_custom_call.1} parent=1 // pred_region
      %s40 = ssub.s32 1024, 1024
      %41 = vsyncadd [#allocation6], %s40
      %s42 = sshll.u32 [#allocation7], 4
      %s43 = int_to_ptr.vmem [resolvable:$true] %s42
      %48 = dma.hbm_to_vmem [thread:$0]  %s3, 1024, %s43, [#allocation6], 64, 64, 4
    $region17: #{tpu_custom_call.1} parent=1 // pred_fallthru
      _
    // Predicated region
    $region18: #{tpu_custom_call.1} parent=1 // pred_check
      _
    $region19: #{tpu_custom_call.1} parent=1 // pred_check_branch
      %50 = sbr.rel (0) target = $region21
    $region20: #{tpu_custom_call.1} parent=1 // pred_region
      _
    $region21: #{tpu_custom_call.1} parent=1 // pred_fallthru
      _
    // Predicated region
    $region22: #{tpu_custom_call.1} parent=1 // pred_check
      _
    $region23: #{tpu_custom_call.1} parent=1 // pred_check_branch
      %52 = sbr.rel (0) target = $region25
    $region24: #{tpu_custom_call.1} parent=1 // pred_region
      %53 = dma.done [#allocation3], 256
    $region25: #{tpu_custom_call.1} parent=1 // pred_fallthru
      _
    // Predicated region
    $region26: #{tpu_custom_call.1} parent=1 // pred_check
      _
    $region27: #{tpu_custom_call.1} parent=1 // pred_check_branch
      %55 = sbr.rel (0) target = $region29
    $region28: #{tpu_custom_call.1} parent=1 // pred_region
      %56 = dma.done [#allocation6], 8192
    $region29: #{tpu_custom_call.1} parent=1 // pred_fallthru
      _
    // Predicated region
    $region30: #{tpu_custom_call.1} parent=1 // pred_check
      _
    $region31: #{tpu_custom_call.1} parent=1 // pred_check_branch
      %58 = sbr.rel (0) target = $region33
    $region32: #{tpu_custom_call.1} parent=1 // pred_region
      %59 = dma.done [#allocation6], 1024
    $region33: #{tpu_custom_call.1} parent=1 // pred_fallthru
      _
    %v61 = vld [vmem:[#allocation2] sm:$0xff]
    %v62 = vld [vmem:[#allocation2 + $0x8] sm:$0xff]
    %v65 = vcombine.high %v61, %v61
    %v67 = vunpack.c.l.s4 1983009808
    %v68 = vunpack.c.0.s8 %v67
    %v69 = vlaneseq
    %v70 = vshrl.u32 %v69, 7
    %v71 = vsub.s32 %v68, %v70
    %v72 = vrot.slane %v61, %v71
    %v74 = vunpack.c.l.s4 1983009808
    %v75 = vunpack.c.0.s8 %v74
    %v76 = vlaneseq
    %v77 = vshrl.u32 %v76, 7
    %v78 = vsub.s32 %v75, %v77
    %v79 = vrot.slane %v65, %v78
    %v80 = vcombine.high %v72, %v72
    %v81 = vcombine.high %v79, %v79
    %v82 = vcombine.high %v62, %v62
    %v84 = vunpack.c.l.s4 1983009808
    %v85 = vunpack.c.0.s8 %v84
    %v86 = vlaneseq
    %v87 = vshrl.u32 %v86, 7
    %v88 = vsub.s32 %v85, %v87
    %v89 = vrot.slane %v62, %v88
    %v91 = vunpack.c.l.s4 1983009808
    %v92 = vunpack.c.0.s8 %v91
    %v93 = vlaneseq
    %v94 = vshrl.u32 %v93, 7
    %v95 = vsub.s32 %v92, %v94
    %v96 = vrot.slane %v82, %v95
    %v97 = vcombine.high %v89, %v89
    %v98 = vcombine.high %v96, %v96
    %v107 = vpack.c.bf16 %v72, %v72
    %v108 = vpack.c.bf16 %v80, %v80
    %v109 = vpack.c.bf16 %v79, %v79
    %v110 = vpack.c.bf16 %v81, %v81
    %v111 = vpack.c.bf16 %v89, %v89
    %v112 = vpack.c.bf16 %v97, %v97
    %v113 = vpack.c.bf16 %v96, %v96
    %v114 = vpack.c.bf16 %v98, %v98
    %v115 = vld [vmem:[#allocation5] sm:$0xf]
    %v116 = vld [vmem:[#allocation5 + $0x4] sm:$0xf]
    %v117 = vld [vmem:[#allocation5 + $0x8] sm:$0xf]
    %v118 = vld [vmem:[#allocation5 + $0xc] sm:$0xf]
    %v119 = vld [vmem:[#allocation5 + $0x10] sm:$0xf]
    %v120 = vld [vmem:[#allocation5 + $0x14] sm:$0xf]
    %v121 = vld [vmem:[#allocation5 + $0x18] sm:$0xf]
    %v122 = vld [vmem:[#allocation5 + $0x1c] sm:$0xf]
    %v123 = vld [vmem:[#allocation5 + $0x20] sm:$0xf]
    %v124 = vld [vmem:[#allocation5 + $0x24] sm:$0xf]
    %v125 = vld [vmem:[#allocation5 + $0x28] sm:$0xf]
    %v126 = vld [vmem:[#allocation5 + $0x2c] sm:$0xf]
    %v127 = vld [vmem:[#allocation5 + $0x30] sm:$0xf]
    %v128 = vld [vmem:[#allocation5 + $0x34] sm:$0xf]
    %v129 = vld [vmem:[#allocation5 + $0x38] sm:$0xf]
    %v130 = vld [vmem:[#allocation5 + $0x3c] sm:$0xf]
    %v131 = vld [vmem:[#allocation5 + $0x40] sm:$0xf]
    %v132 = vld [vmem:[#allocation5 + $0x44] sm:$0xf]
    %v133 = vld [vmem:[#allocation5 + $0x48] sm:$0xf]
    %v134 = vld [vmem:[#allocation5 + $0x4c] sm:$0xf]
    %v135 = vld [vmem:[#allocation5 + $0x50] sm:$0xf]
    %v136 = vld [vmem:[#allocation5 + $0x54] sm:$0xf]
    %v137 = vld [vmem:[#allocation5 + $0x58] sm:$0xf]
    %v138 = vld [vmem:[#allocation5 + $0x5c] sm:$0xf]
    %v139 = vld [vmem:[#allocation5 + $0x60] sm:$0xf]
    %v140 = vld [vmem:[#allocation5 + $0x64] sm:$0xf]
    %v141 = vld [vmem:[#allocation5 + $0x68] sm:$0xf]
    %v142 = vld [vmem:[#allocation5 + $0x6c] sm:$0xf]
    %v143 = vld [vmem:[#allocation5 + $0x70] sm:$0xf]
    %v144 = vld [vmem:[#allocation5 + $0x74] sm:$0xf]
    %v145 = vld [vmem:[#allocation5 + $0x78] sm:$0xf]
    %v146 = vld [vmem:[#allocation5 + $0x7c] sm:$0xf]
    %v147 = vld [vmem:[#allocation5 + $0x80] sm:$0xf]
    %v148 = vld [vmem:[#allocation5 + $0x84] sm:$0xf]
    %v149 = vld [vmem:[#allocation5 + $0x88] sm:$0xf]
    %v150 = vld [vmem:[#allocation5 + $0x8c] sm:$0xf]
    %v151 = vld [vmem:[#allocation5 + $0x90] sm:$0xf]
    %v152 = vld [vmem:[#allocation5 + $0x94] sm:$0xf]
    %v153 = vld [vmem:[#allocation5 + $0x98] sm:$0xf]
    %v154 = vld [vmem:[#allocation5 + $0x9c] sm:$0xf]
    %v155 = vld [vmem:[#allocation5 + $0xa0] sm:$0xf]
    %v156 = vld [vmem:[#allocation5 + $0xa4] sm:$0xf]
    %v157 = vld [vmem:[#allocation5 + $0xa8] sm:$0xf]
    %v158 = vld [vmem:[#allocation5 + $0xac] sm:$0xf]
    %v159 = vld [vmem:[#allocation5 + $0xb0] sm:$0xf]
    %v160 = vld [vmem:[#allocation5 + $0xb4] sm:$0xf]
    %v161 = vld [vmem:[#allocation5 + $0xb8] sm:$0xf]
    %v162 = vld [vmem:[#allocation5 + $0xbc] sm:$0xf]
    %v163 = vld [vmem:[#allocation5 + $0xc0] sm:$0xf]
    %v164 = vld [vmem:[#allocation5 + $0xc4] sm:$0xf]
    %v165 = vld [vmem:[#allocation5 + $0xc8] sm:$0xf]
    %v166 = vld [vmem:[#allocation5 + $0xcc] sm:$0xf]
    %v167 = vld [vmem:[#allocation5 + $0xd0] sm:$0xf]
    %v168 = vld [vmem:[#allocation5 + $0xd4] sm:$0xf]
    %v169 = vld [vmem:[#allocation5 + $0xd8] sm:$0xf]
    %v170 = vld [vmem:[#allocation5 + $0xdc] sm:$0xf]
    %v171 = vld [vmem:[#allocation5 + $0xe0] sm:$0xf]
    %v172 = vld [vmem:[#allocation5 + $0xe4] sm:$0xf]
    %v173 = vld [vmem:[#allocation5 + $0xe8] sm:$0xf]
    %v174 = vld [vmem:[#allocation5 + $0xec] sm:$0xf]
    %v175 = vld [vmem:[#allocation5 + $0xf0] sm:$0xf]
    %v176 = vld [vmem:[#allocation5 + $0xf4] sm:$0xf]
    %v177 = vld [vmem:[#allocation5 + $0xf8] sm:$0xf]
    %v178 = vld [vmem:[#allocation5 + $0xfc] sm:$0xf]
    %v179 = vld [vmem:[#allocation5 + $0x100] sm:$0xf]
    %v180 = vld [vmem:[#allocation5 + $0x104] sm:$0xf]
    %v181 = vld [vmem:[#allocation5 + $0x108] sm:$0xf]
    %v182 = vld [vmem:[#allocation5 + $0x10c] sm:$0xf]
    %v183 = vld [vmem:[#allocation5 + $0x110] sm:$0xf]
    %v184 = vld [vmem:[#allocation5 + $0x114] sm:$0xf]
    %v185 = vld [vmem:[#allocation5 + $0x118] sm:$0xf]
    %v186 = vld [vmem:[#allocation5 + $0x11c] sm:$0xf]
    %v187 = vld [vmem:[#allocation5 + $0x120] sm:$0xf]
    %v188 = vld [vmem:[#allocation5 + $0x124] sm:$0xf]
    %v189 = vld [vmem:[#allocation5 + $0x128] sm:$0xf]
    %v190 = vld [vmem:[#allocation5 + $0x12c] sm:$0xf]
    %v191 = vld [vmem:[#allocation5 + $0x130] sm:$0xf]
    %v192 = vld [vmem:[#allocation5 + $0x134] sm:$0xf]
    %v193 = vld [vmem:[#allocation5 + $0x138] sm:$0xf]
    %v194 = vld [vmem:[#allocation5 + $0x13c] sm:$0xf]
    %v195 = vld [vmem:[#allocation5 + $0x140] sm:$0xf]
    %v196 = vld [vmem:[#allocation5 + $0x144] sm:$0xf]
    %v197 = vld [vmem:[#allocation5 + $0x148] sm:$0xf]
    %v198 = vld [vmem:[#allocation5 + $0x14c] sm:$0xf]
    %v199 = vld [vmem:[#allocation5 + $0x150] sm:$0xf]
    %v200 = vld [vmem:[#allocation5 + $0x154] sm:$0xf]
    %v201 = vld [vmem:[#allocation5 + $0x158] sm:$0xf]
    %v202 = vld [vmem:[#allocation5 + $0x15c] sm:$0xf]
    %v203 = vld [vmem:[#allocation5 + $0x160] sm:$0xf]
    %v204 = vld [vmem:[#allocation5 + $0x164] sm:$0xf]
    %v205 = vld [vmem:[#allocation5 + $0x168] sm:$0xf]
    %v206 = vld [vmem:[#allocation5 + $0x16c] sm:$0xf]
    %v207 = vld [vmem:[#allocation5 + $0x170] sm:$0xf]
    %v208 = vld [vmem:[#allocation5 + $0x174] sm:$0xf]
    %v209 = vld [vmem:[#allocation5 + $0x178] sm:$0xf]
    %v210 = vld [vmem:[#allocation5 + $0x17c] sm:$0xf]
    %v211 = vld [vmem:[#allocation5 + $0x180] sm:$0xf]
    %v212 = vld [vmem:[#allocation5 + $0x184] sm:$0xf]
    %v213 = vld [vmem:[#allocation5 + $0x188] sm:$0xf]
    %v214 = vld [vmem:[#allocation5 + $0x18c] sm:$0xf]
    %v215 = vld [vmem:[#allocation5 + $0x190] sm:$0xf]
    %v216 = vld [vmem:[#allocation5 + $0x194] sm:$0xf]
    %v217 = vld [vmem:[#allocation5 + $0x198] sm:$0xf]
    %v218 = vld [vmem:[#allocation5 + $0x19c] sm:$0xf]
    %v219 = vld [vmem:[#allocation5 + $0x1a0] sm:$0xf]
    %v220 = vld [vmem:[#allocation5 + $0x1a4] sm:$0xf]
    %v221 = vld [vmem:[#allocation5 + $0x1a8] sm:$0xf]
    %v222 = vld [vmem:[#allocation5 + $0x1ac] sm:$0xf]
    %v223 = vld [vmem:[#allocation5 + $0x1b0] sm:$0xf]
    %v224 = vld [vmem:[#allocation5 + $0x1b4] sm:$0xf]
    %v225 = vld [vmem:[#allocation5 + $0x1b8] sm:$0xf]
    %v226 = vld [vmem:[#allocation5 + $0x1bc] sm:$0xf]
    %v227 = vld [vmem:[#allocation5 + $0x1c0] sm:$0xf]
    %v228 = vld [vmem:[#allocation5 + $0x1c4] sm:$0xf]
    %v229 = vld [vmem:[#allocation5 + $0x1c8] sm:$0xf]
    %v230 = vld [vmem:[#allocation5 + $0x1cc] sm:$0xf]
    %v231 = vld [vmem:[#allocation5 + $0x1d0] sm:$0xf]
    %v232 = vld [vmem:[#allocation5 + $0x1d4] sm:$0xf]
    %v233 = vld [vmem:[#allocation5 + $0x1d8] sm:$0xf]
    %v234 = vld [vmem:[#allocation5 + $0x1dc] sm:$0xf]
    %v235 = vld [vmem:[#allocation5 + $0x1e0] sm:$0xf]
    %v236 = vld [vmem:[#allocation5 + $0x1e4] sm:$0xf]
    %v237 = vld [vmem:[#allocation5 + $0x1e8] sm:$0xf]
    %v238 = vld [vmem:[#allocation5 + $0x1ec] sm:$0xf]
    %v239 = vld [vmem:[#allocation5 + $0x1f0] sm:$0xf]
    %v240 = vld [vmem:[#allocation5 + $0x1f4] sm:$0xf]
    %v241 = vld [vmem:[#allocation5 + $0x1f8] sm:$0xf]
    %v242 = vld [vmem:[#allocation5 + $0x1fc] sm:$0xf]
    %v243 = vld [vmem:[%s2] sm:$0x1]
    %v245 = vlaneseq
    %v246 = vshrl.u32 %v245, 7
    %v247 = vsub.s32 0, %v246
    %v248 = vrot.slane %v243, %v247
    %v378 = vunpack.c.l.b16 %v115
    %v379 = vunpack.c.l.b16 %v116
    %v380 = vunpack.c.l.b16 %v117
    %v381 = vunpack.c.l.b16 %v118
    %v382 = vunpack.c.l.b16 %v119
    %v383 = vunpack.c.l.b16 %v120
    %v384 = vunpack.c.l.b16 %v121
    %v385 = vunpack.c.l.b16 %v122
    %v386 = vunpack.c.l.b16 %v123
    %v387 = vunpack.c.l.b16 %v124
    %v388 = vunpack.c.l.b16 %v125
    %v389 = vunpack.c.l.b16 %v126
    %v390 = vunpack.c.l.b16 %v127
    %v391 = vunpack.c.l.b16 %v128
    %v392 = vunpack.c.l.b16 %v129
    %v393 = vunpack.c.l.b16 %v130
    %v394 = vunpack.c.l.b16 %v131
    %v395 = vunpack.c.l.b16 %v132
    %v396 = vunpack.c.l.b16 %v133
    %v397 = vunpack.c.l.b16 %v134
    %v398 = vunpack.c.l.b16 %v135
    %v399 = vunpack.c.l.b16 %v136
    %v400 = vunpack.c.l.b16 %v137
    %v401 = vunpack.c.l.b16 %v138
    %v402 = vunpack.c.l.b16 %v139
    %v403 = vunpack.c.l.b16 %v140
    %v404 = vunpack.c.l.b16 %v141
    %v405 = vunpack.c.l.b16 %v142
    %v406 = vunpack.c.l.b16 %v143
    %v407 = vunpack.c.l.b16 %v144
    %v408 = vunpack.c.l.b16 %v145
    %v409 = vunpack.c.l.b16 %v146
    %v410 = vunpack.c.l.b16 %v147
    %v411 = vunpack.c.l.b16 %v148
    %v412 = vunpack.c.l.b16 %v149
    %v413 = vunpack.c.l.b16 %v150
    %v414 = vunpack.c.l.b16 %v151
    %v415 = vunpack.c.l.b16 %v152
    %v416 = vunpack.c.l.b16 %v153
    %v417 = vunpack.c.l.b16 %v154
    %v418 = vunpack.c.l.b16 %v155
    %v419 = vunpack.c.l.b16 %v156
    %v420 = vunpack.c.l.b16 %v157
    %v421 = vunpack.c.l.b16 %v158
    %v422 = vunpack.c.l.b16 %v159
    %v423 = vunpack.c.l.b16 %v160
    %v424 = vunpack.c.l.b16 %v161
    %v425 = vunpack.c.l.b16 %v162
    %v426 = vunpack.c.l.b16 %v163
    %v427 = vunpack.c.l.b16 %v164
    %v428 = vunpack.c.l.b16 %v165
    %v429 = vunpack.c.l.b16 %v166
    %v430 = vunpack.c.l.b16 %v167
    %v431 = vunpack.c.l.b16 %v168
    %v432 = vunpack.c.l.b16 %v169
    %v433 = vunpack.c.l.b16 %v170
    %v434 = vunpack.c.l.b16 %v171
    %v435 = vunpack.c.l.b16 %v172
    %v436 = vunpack.c.l.b16 %v173
    %v437 = vunpack.c.l.b16 %v174
    %v438 = vunpack.c.l.b16 %v175
    %v439 = vunpack.c.l.b16 %v176
    %v440 = vunpack.c.l.b16 %v177
    %v441 = vunpack.c.l.b16 %v178
    %v442 = vunpack.c.l.b16 %v179
    %v443 = vunpack.c.l.b16 %v180
    %v444 = vunpack.c.l.b16 %v181
    %v445 = vunpack.c.l.b16 %v182
    %v446 = vunpack.c.l.b16 %v183
    %v447 = vunpack.c.l.b16 %v184
    %v448 = vunpack.c.l.b16 %v185
    %v449 = vunpack.c.l.b16 %v186
    %v450 = vunpack.c.l.b16 %v187
    %v451 = vunpack.c.l.b16 %v188
    %v452 = vunpack.c.l.b16 %v189
    %v453 = vunpack.c.l.b16 %v190
    %v454 = vunpack.c.l.b16 %v191
    %v455 = vunpack.c.l.b16 %v192
    %v456 = vunpack.c.l.b16 %v193
    %v457 = vunpack.c.l.b16 %v194
    %v458 = vunpack.c.l.b16 %v195
    %v459 = vunpack.c.l.b16 %v196
    %v460 = vunpack.c.l.b16 %v197
    %v461 = vunpack.c.l.b16 %v198
    %v462 = vunpack.c.l.b16 %v199
    %v463 = vunpack.c.l.b16 %v200
    %v464 = vunpack.c.l.b16 %v201
    %v465 = vunpack.c.l.b16 %v202
    %v466 = vunpack.c.l.b16 %v203
    %v467 = vunpack.c.l.b16 %v204
    %v468 = vunpack.c.l.b16 %v205
    %v469 = vunpack.c.l.b16 %v206
    %v470 = vunpack.c.l.b16 %v207
    %v471 = vunpack.c.l.b16 %v208
    %v472 = vunpack.c.l.b16 %v209
    %v473 = vunpack.c.l.b16 %v210
    %v474 = vunpack.c.l.b16 %v211
    %v475 = vunpack.c.l.b16 %v212
    %v476 = vunpack.c.l.b16 %v213
    %v477 = vunpack.c.l.b16 %v214
    %v478 = vunpack.c.l.b16 %v215
    %v479 = vunpack.c.l.b16 %v216
    %v480 = vunpack.c.l.b16 %v217
    %v481 = vunpack.c.l.b16 %v218
    %v482 = vunpack.c.l.b16 %v219
    %v483 = vunpack.c.l.b16 %v220
    %v484 = vunpack.c.l.b16 %v221
    %v485 = vunpack.c.l.b16 %v222
    %v486 = vunpack.c.l.b16 %v223
    %v487 = vunpack.c.l.b16 %v224
    %v488 = vunpack.c.l.b16 %v225
    %v489 = vunpack.c.l.b16 %v226
    %v490 = vunpack.c.l.b16 %v227
    %v491 = vunpack.c.l.b16 %v228
    %v492 = vunpack.c.l.b16 %v229
    %v493 = vunpack.c.l.b16 %v230
    %v494 = vunpack.c.l.b16 %v231
    %v495 = vunpack.c.l.b16 %v232
    %v496 = vunpack.c.l.b16 %v233
    %v497 = vunpack.c.l.b16 %v234
    %v498 = vunpack.c.l.b16 %v235
    %v499 = vunpack.c.l.b16 %v236
    %v500 = vunpack.c.l.b16 %v237
    %v501 = vunpack.c.l.b16 %v238
    %v502 = vunpack.c.l.b16 %v239
    %v503 = vunpack.c.l.b16 %v240
    %v504 = vunpack.c.l.b16 %v241
    %v505 = vunpack.c.l.b16 %v242
    %v506 = vpack.c.b16 %v379, %v378
    %v507 = vpack.c.b16 %v381, %v380
    %v508 = vpack.c.b16 %v383, %v382
    %v509 = vpack.c.b16 %v385, %v384
    %v510 = vpack.c.b16 %v387, %v386
    %v511 = vpack.c.b16 %v389, %v388
    %v512 = vpack.c.b16 %v391, %v390
    %v513 = vpack.c.b16 %v393, %v392
    %v514 = vpack.c.b16 %v395, %v394
    %v515 = vpack.c.b16 %v397, %v396
    %v516 = vpack.c.b16 %v399, %v398
    %v517 = vpack.c.b16 %v401, %v400
    %v518 = vpack.c.b16 %v403, %v402
    %v519 = vpack.c.b16 %v405, %v404
    %v520 = vpack.c.b16 %v407, %v406
    %v521 = vpack.c.b16 %v409, %v408
    %v522 = vpack.c.b16 %v411, %v410
    %v523 = vpack.c.b16 %v413, %v412
    %v524 = vpack.c.b16 %v415, %v414
    %v525 = vpack.c.b16 %v417, %v416
    %v526 = vpack.c.b16 %v419, %v418
    %v527 = vpack.c.b16 %v421, %v420
    %v528 = vpack.c.b16 %v423, %v422
    %v529 = vpack.c.b16 %v425, %v424
    %v530 = vpack.c.b16 %v427, %v426
    %v531 = vpack.c.b16 %v429, %v428
    %v532 = vpack.c.b16 %v431, %v430
    %v533 = vpack.c.b16 %v433, %v432
    %v534 = vpack.c.b16 %v435, %v434
    %v535 = vpack.c.b16 %v437, %v436
    %v536 = vpack.c.b16 %v439, %v438
    %v537 = vpack.c.b16 %v441, %v440
    %v538 = vpack.c.b16 %v443, %v442
    %v539 = vpack.c.b16 %v445, %v444
    %v540 = vpack.c.b16 %v447, %v446
    %v541 = vpack.c.b16 %v449, %v448
    %v542 = vpack.c.b16 %v451, %v450
    %v543 = vpack.c.b16 %v453, %v452
    %v544 = vpack.c.b16 %v455, %v454
    %v545 = vpack.c.b16 %v457, %v456
    %v546 = vpack.c.b16 %v459, %v458
    %v547 = vpack.c.b16 %v461, %v460
    %v548 = vpack.c.b16 %v463, %v462
    %v549 = vpack.c.b16 %v465, %v464
    %v550 = vpack.c.b16 %v467, %v466
    %v551 = vpack.c.b16 %v469, %v468
    %v552 = vpack.c.b16 %v471, %v470
    %v553 = vpack.c.b16 %v473, %v472
    %v554 = vpack.c.b16 %v475, %v474
    %v555 = vpack.c.b16 %v477, %v476
    %v556 = vpack.c.b16 %v479, %v478
    %v557 = vpack.c.b16 %v481, %v480
    %v558 = vpack.c.b16 %v483, %v482
    %v559 = vpack.c.b16 %v485, %v484
    %v560 = vpack.c.b16 %v487, %v486
    %v561 = vpack.c.b16 %v489, %v488
    %v562 = vpack.c.b16 %v491, %v490
    %v563 = vpack.c.b16 %v493, %v492
    %v564 = vpack.c.b16 %v495, %v494
    %v565 = vpack.c.b16 %v497, %v496
    %v566 = vpack.c.b16 %v499, %v498
    %v567 = vpack.c.b16 %v501, %v500
    %v568 = vpack.c.b16 %v503, %v502
    %v569 = vpack.c.b16 %v505, %v504
    %634 = vmatprep.subr.bf16.mxu0 0
    %635 = vmatpush1.bf16.msra.mxu0 %v506
    %636 = vmatprep.subr.bf16.mxu0 0
    %637 = vmatpush1.bf16.msra.mxu0 %v507
    %638 = vmatprep.subr.bf16.mxu0 0
    %639 = vmatpush1.bf16.msra.mxu0 %v508
    %640 = vmatprep.subr.bf16.mxu0 0
    %641 = vmatpush1.bf16.msra.mxu0 %v509
    %642 = vmatprep.subr.bf16.mxu0 0
    %643 = vmatpush1.bf16.msra.mxu0 %v510
    %644 = vmatprep.subr.bf16.mxu0 0
    %645 = vmatpush1.bf16.msra.mxu0 %v511
    %646 = vmatprep.subr.bf16.mxu0 0
    %647 = vmatpush1.bf16.msra.mxu0 %v512
    %648 = vmatprep.subr.bf16.mxu0 0
    %649 = vmatpush1.bf16.msra.mxu0 %v513
    %650 = vmatprep.subr.bf16.mxu0 0
    %651 = vmatpush1.bf16.msra.mxu0 %v514
    %652 = vmatprep.subr.bf16.mxu0 0
    %653 = vmatpush1.bf16.msra.mxu0 %v515
    %654 = vmatprep.subr.bf16.mxu0 0
    %655 = vmatpush1.bf16.msra.mxu0 %v516
    %656 = vmatprep.subr.bf16.mxu0 0
    %657 = vmatpush1.bf16.msra.mxu0 %v517
    %658 = vmatprep.subr.bf16.mxu0 0
    %659 = vmatpush1.bf16.msra.mxu0 %v518
    %660 = vmatprep.subr.bf16.mxu0 0
    %661 = vmatpush1.bf16.msra.mxu0 %v519
    %662 = vmatprep.subr.bf16.mxu0 0
    %663 = vmatpush1.bf16.msra.mxu0 %v520
    %664 = vmatprep.subr.bf16.mxu0 0
    %665 = vmatpush1.bf16.msra.mxu0 %v521
    %666 = vmatprep.mubr.bf16.mxu0 %v108
    %667 = vmatmul.mubr.bf16.gmra.mrb[0].mxu0 %v107
    %v668 = vpop.f32.mrb[0].mxu0
    %v669 = vadd.f32 %v248, %v668
    %v670 = vpop.f32.mrb[0].mxu0
    %v671 = vpop.f32.mrb[0].mxu0
    %v672 = vpop.f32.mrb[0].mxu0
    %673 = vdwg.mxu0
    %674 = vmatprep.subr.bf16.mxu0 0
    %675 = vmatpush1.bf16.msra.mxu0 %v522
    %676 = vmatprep.subr.bf16.mxu0 0
    %677 = vmatpush1.bf16.msra.mxu0 %v523
    %678 = vmatprep.subr.bf16.mxu0 0
    %679 = vmatpush1.bf16.msra.mxu0 %v524
    %680 = vmatprep.subr.bf16.mxu0 0
    %681 = vmatpush1.bf16.msra.mxu0 %v525
    %682 = vmatprep.subr.bf16.mxu0 0
    %683 = vmatpush1.bf16.msra.mxu0 %v526
    %684 = vmatprep.subr.bf16.mxu0 0
    %685 = vmatpush1.bf16.msra.mxu0 %v527
    %686 = vmatprep.subr.bf16.mxu0 0
    %687 = vmatpush1.bf16.msra.mxu0 %v528
    %688 = vmatprep.subr.bf16.mxu0 0
    %689 = vmatpush1.bf16.msra.mxu0 %v529
    %690 = vmatprep.subr.bf16.mxu0 0
    %691 = vmatpush1.bf16.msra.mxu0 %v530
    %692 = vmatprep.subr.bf16.mxu0 0
    %693 = vmatpush1.bf16.msra.mxu0 %v531
    %694 = vmatprep.subr.bf16.mxu0 0
    %695 = vmatpush1.bf16.msra.mxu0 %v532
    %696 = vmatprep.subr.bf16.mxu0 0
    %697 = vmatpush1.bf16.msra.mxu0 %v533
    %698 = vmatprep.subr.bf16.mxu0 0
    %699 = vmatpush1.bf16.msra.mxu0 %v534
    %700 = vmatprep.subr.bf16.mxu0 0
    %701 = vmatpush1.bf16.msra.mxu0 %v535
    %702 = vmatprep.subr.bf16.mxu0 0
    %703 = vmatpush1.bf16.msra.mxu0 %v536
    %704 = vmatprep.subr.bf16.mxu0 0
    %705 = vmatpush1.bf16.msra.mxu0 %v537
    %706 = vmatprep.mubr.bf16.mxu0 %v110
    %707 = vmatmul.mubr.bf16.gmra.mrb[0].mxu0 %v109
    %v708 = vpop.f32.mrb[0].mxu0
    %v709 = vadd.f32 %v669, %v708
    %v710 = vpop.f32.mrb[0].mxu0
    %v711 = vpop.f32.mrb[0].mxu0
    %v712 = vpop.f32.mrb[0].mxu0
    %713 = vdwg.mxu0
    %714 = vmatprep.subr.bf16.mxu0 0
    %715 = vmatpush1.bf16.msra.mxu0 %v538
    %716 = vmatprep.subr.bf16.mxu0 0
    %717 = vmatpush1.bf16.msra.mxu0 %v539
    %718 = vmatprep.subr.bf16.mxu0 0
    %719 = vmatpush1.bf16.msra.mxu0 %v540
    %720 = vmatprep.subr.bf16.mxu0 0
    %721 = vmatpush1.bf16.msra.mxu0 %v541
    %722 = vmatprep.subr.bf16.mxu0 0
    %723 = vmatpush1.bf16.msra.mxu0 %v542
    %724 = vmatprep.subr.bf16.mxu0 0
    %725 = vmatpush1.bf16.msra.mxu0 %v543
    %726 = vmatprep.subr.bf16.mxu0 0
    %727 = vmatpush1.bf16.msra.mxu0 %v544
    %728 = vmatprep.subr.bf16.mxu0 0
    %729 = vmatpush1.bf16.msra.mxu0 %v545
    %730 = vmatprep.subr.bf16.mxu0 0
    %731 = vmatpush1.bf16.msra.mxu0 %v546
    %732 = vmatprep.subr.bf16.mxu0 0
    %733 = vmatpush1.bf16.msra.mxu0 %v547
    %734 = vmatprep.subr.bf16.mxu0 0
    %735 = vmatpush1.bf16.msra.mxu0 %v548
    %736 = vmatprep.subr.bf16.mxu0 0
    %737 = vmatpush1.bf16.msra.mxu0 %v549
    %738 = vmatprep.subr.bf16.mxu0 0
    %739 = vmatpush1.bf16.msra.mxu0 %v550
    %740 = vmatprep.subr.bf16.mxu0 0
    %741 = vmatpush1.bf16.msra.mxu0 %v551
    %742 = vmatprep.subr.bf16.mxu0 0
    %743 = vmatpush1.bf16.msra.mxu0 %v552
    %744 = vmatprep.subr.bf16.mxu0 0
    %745 = vmatpush1.bf16.msra.mxu0 %v553
    %746 = vmatprep.mubr.bf16.mxu0 %v112
    %747 = vmatmul.mubr.bf16.gmra.mrb[0].mxu0 %v111
    %v748 = vpop.f32.mrb[0].mxu0
    %v749 = vadd.f32 %v709, %v748
    %v750 = vpop.f32.mrb[0].mxu0
    %v751 = vpop.f32.mrb[0].mxu0
    %v752 = vpop.f32.mrb[0].mxu0
    %753 = vdwg.mxu0
    %754 = vmatprep.subr.bf16.mxu0 0
    %755 = vmatpush1.bf16.msra.mxu0 %v554
    %756 = vmatprep.subr.bf16.mxu0 0
    %757 = vmatpush1.bf16.msra.mxu0 %v555
    %758 = vmatprep.subr.bf16.mxu0 0
    %759 = vmatpush1.bf16.msra.mxu0 %v556
    %760 = vmatprep.subr.bf16.mxu0 0
    %761 = vmatpush1.bf16.msra.mxu0 %v557
    %762 = vmatprep.subr.bf16.mxu0 0
    %763 = vmatpush1.bf16.msra.mxu0 %v558
    %764 = vmatprep.subr.bf16.mxu0 0
    %765 = vmatpush1.bf16.msra.mxu0 %v559
    %766 = vmatprep.subr.bf16.mxu0 0
    %767 = vmatpush1.bf16.msra.mxu0 %v560
    %768 = vmatprep.subr.bf16.mxu0 0
    %769 = vmatpush1.bf16.msra.mxu0 %v561
    %770 = vmatprep.subr.bf16.mxu0 0
    %771 = vmatpush1.bf16.msra.mxu0 %v562
    %772 = vmatprep.subr.bf16.mxu0 0
    %773 = vmatpush1.bf16.msra.mxu0 %v563
    %774 = vmatprep.subr.bf16.mxu0 0
    %775 = vmatpush1.bf16.msra.mxu0 %v564
    %776 = vmatprep.subr.bf16.mxu0 0
    %777 = vmatpush1.bf16.msra.mxu0 %v565
    %778 = vmatprep.subr.bf16.mxu0 0
    %779 = vmatpush1.bf16.msra.mxu0 %v566
    %780 = vmatprep.subr.bf16.mxu0 0
    %781 = vmatpush1.bf16.msra.mxu0 %v567
    %782 = vmatprep.subr.bf16.mxu0 0
    %783 = vmatpush1.bf16.msra.mxu0 %v568
    %784 = vmatprep.subr.bf16.mxu0 0
    %785 = vmatpush1.bf16.msra.mxu0 %v569
    %786 = vmatprep.mubr.bf16.mxu0 %v114
    %787 = vmatmul.mubr.bf16.gmra.mrb[0].mxu0 %v113
    %v788 = vpop.f32.mrb[0].mxu0
    %v789 = vadd.f32 %v749, %v788
    %v790 = vpop.f32.mrb[0].mxu0
    %v791 = vpop.f32.mrb[0].mxu0
    %v792 = vpop.f32.mrb[0].mxu0
    %793 = vdwg.mxu0
    %v794 = vmax.f32 %v789, 0.0
    %v795 = vpack.c.bf16 %v794, %v794
    %v796 = vld [vmem:[#allocation7] sm:$0xf]
    %v797 = vld [vmem:[#allocation7 + $0x4] sm:$0xf]
    %v798 = vld [vmem:[#allocation7 + $0x8] sm:$0xf]
    %v799 = vld [vmem:[#allocation7 + $0xc] sm:$0xf]
    %v800 = vld [vmem:[#allocation7 + $0x10] sm:$0xf]
    %v801 = vld [vmem:[#allocation7 + $0x14] sm:$0xf]
    %v802 = vld [vmem:[#allocation7 + $0x18] sm:$0xf]
    %v803 = vld [vmem:[#allocation7 + $0x1c] sm:$0xf]
    %v804 = vld [vmem:[#allocation7 + $0x20] sm:$0xf]
    %v805 = vld [vmem:[#allocation7 + $0x24] sm:$0xf]
    %v806 = vld [vmem:[#allocation7 + $0x28] sm:$0xf]
    %v807 = vld [vmem:[#allocation7 + $0x2c] sm:$0xf]
    %v808 = vld [vmem:[#allocation7 + $0x30] sm:$0xf]
    %v809 = vld [vmem:[#allocation7 + $0x34] sm:$0xf]
    %v810 = vld [vmem:[#allocation7 + $0x38] sm:$0xf]
    %v811 = vld [vmem:[#allocation7 + $0x3c] sm:$0xf]
    %v812 = vld [vmem:[%s4] sm:$0x1]
    %v814 = vlaneseq
    %v815 = vshrl.u32 %v814, 7
    %v816 = vsub.s32 0, %v815
    %v817 = vrot.slane %v812, %v816
    %v835 = vunpack.c.l.b16 %v796
    %v836 = vunpack.c.l.b16 %v797
    %v837 = vunpack.c.l.b16 %v798
    %v838 = vunpack.c.l.b16 %v799
    %v839 = vunpack.c.l.b16 %v800
    %v840 = vunpack.c.l.b16 %v801
    %v841 = vunpack.c.l.b16 %v802
    %v842 = vunpack.c.l.b16 %v803
    %v843 = vunpack.c.l.b16 %v804
    %v844 = vunpack.c.l.b16 %v805
    %v845 = vunpack.c.l.b16 %v806
    %v846 = vunpack.c.l.b16 %v807
    %v847 = vunpack.c.l.b16 %v808
    %v848 = vunpack.c.l.b16 %v809
    %v849 = vunpack.c.l.b16 %v810
    %v850 = vunpack.c.l.b16 %v811
    %v851 = vpack.c.b16 %v836, %v835
    %v852 = vpack.c.b16 %v838, %v837
    %v853 = vpack.c.b16 %v840, %v839
    %v854 = vpack.c.b16 %v842, %v841
    %v855 = vpack.c.b16 %v844, %v843
    %v856 = vpack.c.b16 %v846, %v845
    %v857 = vpack.c.b16 %v848, %v847
    %v858 = vpack.c.b16 %v850, %v849
    %867 = vmatprep.subr.bf16.mxu0 0
    %868 = vmatpush1.bf16.msra.mxu0 %v851
    %869 = vmatprep.subr.bf16.mxu0 0
    %870 = vmatpush1.bf16.msra.mxu0 %v852
    %871 = vmatprep.subr.bf16.mxu0 0
    %872 = vmatpush1.bf16.msra.mxu0 %v853
    %873 = vmatprep.subr.bf16.mxu0 0
    %874 = vmatpush1.bf16.msra.mxu0 %v854
    %875 = vmatprep.subr.bf16.mxu0 0
    %876 = vmatpush1.bf16.msra.mxu0 %v855
    %877 = vmatprep.subr.bf16.mxu0 0
    %878 = vmatpush1.bf16.msra.mxu0 %v856
    %879 = vmatprep.subr.bf16.mxu0 0
    %880 = vmatpush1.bf16.msra.mxu0 %v857
    %881 = vmatprep.subr.bf16.mxu0 0
    %882 = vmatpush1.bf16.msra.mxu0 %v858
    %883 = vmatprep.subr.bf16.mxu0 0
    %884 = vmatpush1.bf16.msra.mxu0 0
    %885 = vmatprep.subr.bf16.mxu0 0
    %886 = vmatpush1.bf16.msra.mxu0 0
    %887 = vmatprep.subr.bf16.mxu0 0
    %888 = vmatpush1.bf16.msra.mxu0 0
    %889 = vmatprep.subr.bf16.mxu0 0
    %890 = vmatpush1.bf16.msra.mxu0 0
    %891 = vmatprep.subr.bf16.mxu0 0
    %892 = vmatpush1.bf16.msra.mxu0 0
    %893 = vmatprep.subr.bf16.mxu0 0
    %894 = vmatpush1.bf16.msra.mxu0 0
    %895 = vmatprep.subr.bf16.mxu0 0
    %896 = vmatpush1.bf16.msra.mxu0 0
    %897 = vmatprep.subr.bf16.mxu0 0
    %898 = vmatpush1.bf16.msra.mxu0 0
    %899 = vmatprep.mubr.bf16.mxu0 0
    %900 = vmatmul.mubr.bf16.gmra.mrb[0].mxu0 %v795
    %v901 = vpop.f32.mrb[0].mxu0
    %v902 = vadd.f32 %v817, %v901
    %v903 = vpop.f32.mrb[0].mxu0
    %v904 = vpop.f32.mrb[0].mxu0
    %v905 = vpop.f32.mrb[0].mxu0
    %906 = vdwg.mxu0
    %vm907 = vcmask 1041408
    %v908 = vsel %vm907, %v902, -inf
    %909 = vmax.xlane.f32.xlu0 %v908
    %v910 = vpop.xlane.xlu0 %909
    %v911 = vsub.f32 %v902, %v910
    %v912 = vmul.f32 %v911, 1.442695
    %v913 = vpow.pop %v912
    %v914 = vsel %vm907, %v913, 0.0
    %915 = vadd.xlane.f32.xlu0 %v914
    %v916 = vpop.xlane.xlu0 %915
    %v917 = vrcp.pop %v916
    %v918 = vmul.f32 %v913, %v917
    %919 = vst [vmem:[#allocation8] sm:$0x3] %v918
    // Predicated region
    $region34: #{tpu_custom_call.1} parent=1 // pred_check
      _
    $region35: #{tpu_custom_call.1} parent=1 // pred_check_branch
      %921 = sbr.rel (0) target = $region37
    $region36: #{tpu_custom_call.1} parent=1 // pred_region
      %s923 = ssub.s32 32, 32
      %924 = vsyncadd [#allocation4], %s923
      %s926 = sshll.u32 [#allocation8], 4
      %s927 = int_to_ptr.vmem [resolvable:$true] %s926
      %929 = dma.vmem_to_hbm [thread:$0]  %s927, 32, %s5, [#allocation4]
    $region37: #{tpu_custom_call.1} parent=1 // pred_fallthru
      _
    // Predicated region
    $region38: #{tpu_custom_call.1} parent=1 // pred_check
      _
    $region39: #{tpu_custom_call.1} parent=1 // pred_check_branch
      %931 = sbr.rel (0) target = $region41
    $region40: #{tpu_custom_call.1} parent=1 // pred_region
      %932 = dma.done [#allocation4], 32
    $region41: #{tpu_custom_call.1} parent=1 // pred_fallthru
      _
    %933 = vsyncpa [#allocation3], 1
    %934 = vsyncpa [#allocation6], 1
    %935 = vsyncpa [#allocation4], 1

</llo_original>
